<compile_context>
chip_gen: v7x
topology: tpu7x:2x2x1
jax: 0.10.0
libtpu: 0.0.40
codegen_flags: <defaults>
</compile_context>

<pallas_src>
import jax
import jax.numpy as jnp
from jax.experimental import pallas as pl
from jax.experimental.pallas import tpu as pltpu


# --------------------------------------------------------------------------
# Small helpers
# --------------------------------------------------------------------------

_SINGLE_BUFFER_OK = None  # resolved lazily by a tiny compile probe


def _probe_single_buffer():
    """Check whether this Pallas build accepts pipeline_mode=pl.Buffered(1)."""
    def copy_kernel(x_ref, o_ref):
        o_ref[...] = x_ref[...]
    try:
        spec = pl.BlockSpec((8, 128), lambda i: (0, 0),
                            pipeline_mode=pl.Buffered(1))
        f = pl.pallas_call(
            copy_kernel,
            out_shape=jax.ShapeDtypeStruct((16, 128), jnp.float32),
            grid=(2,),
            in_specs=[spec],
            out_specs=pl.BlockSpec((8, 128), lambda i: (i, 0)),
        )
        jax.block_until_ready(f(jnp.zeros((8, 128), jnp.float32)))
        return True
    except Exception:
        return False


def _const_spec(block_shape, index_map):
    """BlockSpec for operands whose block never changes across the grid.

    Requests a single pipeline buffer (halves weight/bias VMEM residency, the
    cheapest way to reclaim VMEM on v7x's 64 MiB); falls back to the default
    double-buffered spec if Buffered(1) is not supported by this build.
    """
    global _SINGLE_BUFFER_OK
    if _SINGLE_BUFFER_OK is None:
        _SINGLE_BUFFER_OK = _probe_single_buffer()
    if _SINGLE_BUFFER_OK:
        return pl.BlockSpec(block_shape, index_map,
                            pipeline_mode=pl.Buffered(1))
    return pl.BlockSpec(block_shape, index_map)


def _compiler_params(semantics, block_bytes, scratch_bytes=0):
    """Dimension semantics + an explicit VMEM limit from a resident-set estimate."""
    resident = 2 * sum(block_bytes) + scratch_bytes   # 2x: pipeline double-buffer
    limit = int(min(max(resident + (8 << 20), 32 << 20), 64 << 20))  # v7x cap
    return pltpu.CompilerParams(dimension_semantics=tuple(semantics),
                                vmem_limit_bytes=limit)


def _col_view(arr, col, d):
    """(array, column-block index) selecting a d-wide column slab for a BlockSpec.

    Zero-copy when d is lane-aligned (multiple of 128) or the array is already
    exactly d wide; otherwise falls back to a wrapper-side slice.
    """
    if arr.shape[-1] == d:
        return arr, 0
    if d % 128 == 0:
        return arr, col
    # TODO(synk): non-lane-aligned d_model forces an HBM copy here.
    return arr[..., col * d:(col + 1) * d], 0


# --------------------------------------------------------------------------
# Fused linear projection (x @ W + b), tiled over rows and output columns
# --------------------------------------------------------------------------

def _linear_kernel(x_ref, w_ref, b_ref, o_ref):
    o_ref[...] = (jnp.dot(x_ref[...], w_ref[...],
                          preferred_element_type=jnp.float32)
                  + b_ref[...].astype(jnp.float32)).astype(o_ref.dtype)


def fused_linear(x, w, b, *, row_tile=256, col_tile=512):
    n, d_in = x.shape
    d_out = w.shape[1]
    tm = min(row_tile, n)
    tn = min(col_tile, d_out)
    it = x.dtype.itemsize
    # TODO(synk): add a K reduction axis + f32 accumulator for very large d_in.
    return pl.pallas_call(
        _linear_kernel,
        out_shape=jax.ShapeDtypeStruct((n, d_out), x.dtype),
        grid=(pl.cdiv(n, tm), pl.cdiv(d_out, tn)),
        in_specs=[
            pl.BlockSpec((tm, d_in), lambda i, j: (i, 0)),
            pl.BlockSpec((d_in, tn), lambda i, j: (0, j)),
            pl.BlockSpec((1, tn), lambda i, j: (0, j)),
        ],
        out_specs=pl.BlockSpec((tm, tn), lambda i, j: (i, j)),
        compiler_params=_compiler_params(
            ("parallel", "parallel"),
            [tm * d_in * it, d_in * tn * it, tn * it, tm * tn * it]),
    )(x, w, b.reshape(1, d_out))


# --------------------------------------------------------------------------
# Flash-tiled multi-head attention block:
#   online softmax(QK^T * scale + mask) V over kv tiles
#   -> @Wo + bo -> + residual -> LayerNorm   (epilogue under pl.when(last kv))
# --------------------------------------------------------------------------

def _make_flash_mha_kernel(*, n_heads, dh, scale, eps, mask_mode, tq, tk):
    def kernel(*refs):
        refs = list(refs)
        q_ref = refs.pop(0)                                  # [tq, D]
        k_ref = refs.pop(0)                                  # [tk, D]
        v_ref = refs.pop(0)                                  # [tk, D]
        mask_ref = refs.pop(0) if mask_mode == "array" else None
        (wo_ref, bo_ref, res_ref, g_ref, beta_ref,
         o_ref, m_sc, l_sc, acc_sc) = refs

        ki = pl.program_id(2)

        @pl.when(ki == 0)
        def _():
            m_sc[...] = jnp.full_like(m_sc, -jnp.inf)
            l_sc[...] = jnp.zeros_like(l_sc)
            acc_sc[...] = jnp.zeros_like(acc_sc)

        q = q_ref[...]
        k = k_ref[...]
        v = v_ref[...]

        if mask_mode == "causal":
            # Generate the causal mask on the VPU: no mask DMA at all.
            qi = pl.program_id(1)
            q_pos = qi * tq + jax.lax.broadcasted_iota(jnp.int32, (tq, tk), 0)
            k_pos = ki * tk + jax.lax.broadcasted_iota(jnp.int32, (tq, tk), 1)
            keep = k_pos <= q_pos
        elif mask_mode == "array":
            keep = mask_ref[...] > 0                          # int8 padding mask
        else:
            keep = None

        for h in range(n_heads):                              # static unroll
            sl = slice(h * dh, (h + 1) * dh)
            s = jax.lax.dot_general(
                q[:, sl], k[:, sl], (((1,), (1,)), ((), ())),
                preferred_element_type=jnp.float32) * scale   # [tq, tk] f32
            if keep is not None:
                s = jnp.where(keep, s, -1e9)
            m_prev = m_sc[h]                                  # [tq, 1]
            m_new = jnp.maximum(m_prev, jnp.max(s, axis=-1, keepdims=True))
            alpha = jnp.exp(m_prev - m_new)
            p = jnp.exp(s - m_new)
            l_sc[h] = alpha * l_sc[h] + jnp.sum(p, axis=-1, keepdims=True)
            m_sc[h] = m_new
            acc_sc[:, sl] = (alpha * acc_sc[:, sl]
                             + jnp.dot(p.astype(v.dtype), v[:, sl],
                                       preferred_element_type=jnp.float32))

        @pl.when(ki == pl.num_programs(2) - 1)
        def _():
            # Normalize each head in the lane-dense accumulator (EUP reciprocal).
            for h in range(n_heads):
                sl = slice(h * dh, (h + 1) * dh)
                inv = pl.reciprocal(l_sc[h], approx=True)
                acc_sc[:, sl] = acc_sc[:, sl] * inv
            attn = acc_sc[...]                                # [tq, D] lane-dense
            wo = wo_ref[...]
            y = (jnp.dot(attn.astype(wo.dtype), wo,
                         preferred_element_type=jnp.float32)
                 + bo_ref[...].astype(jnp.float32))
            y = y + res_ref[...].astype(jnp.float32)
            mean = jnp.mean(y, axis=-1, keepdims=True)
            var = jnp.mean((y - mean) ** 2, axis=-1, keepdims=True)
            yn = (y - mean) * jax.lax.rsqrt(var + eps)
            o_ref[...] = (yn * g_ref[...].astype(jnp.float32)
                          + beta_ref[...].astype(jnp.float32)).astype(o_ref.dtype)

    return kernel


def fused_mha_block(q_view, k_view, v_view, *, mask, wo, bo, residual,
                    gamma, beta, n_heads, eps=1e-5, q_tile=256, kv_tile=256):
    q_arr, q_col = q_view
    k_arr, k_col = k_view
    v_arr, v_col = v_view
    B, T, D = residual.shape
    S = k_arr.shape[1]
    dh = D // n_heads
    scale = 1.0 / (dh ** 0.5)
    tq = min(q_tile, T)
    tk = min(kv_tile, S)
    sq = pl.Squeezed()

    if mask is None:
        mask_mode = "none"
    elif isinstance(mask, str):
        assert mask == "causal", "string masks must be 'causal'"
        mask_mode = "causal"
    else:
        mask_mode = "array"
        mask = (mask > 0).astype(jnp.int8)   # ship padding mask as int8

    kernel = _make_flash_mha_kernel(n_heads=n_heads, dh=dh, scale=scale,
                                    eps=eps, mask_mode=mask_mode, tq=tq, tk=tk)

    in_specs = [
        pl.BlockSpec((sq, tq, D), lambda b, qi, ki, c=q_col: (b, qi, c)),
        pl.BlockSpec((sq, tk, D), lambda b, qi, ki, c=k_col: (b, ki, c)),
        pl.BlockSpec((sq, tk, D), lambda b, qi, ki, c=v_col: (b, ki, c)),
    ]
    args = [q_arr, k_arr, v_arr]
    if mask_mode == "array":
        in_specs.append(pl.BlockSpec((sq, tq, tk),
                                     lambda b, qi, ki: (b, qi, ki)))
        args.append(mask)
    in_specs += [
        _const_spec((D, D), lambda b, qi, ki: (0, 0)),
        _const_spec((1, D), lambda b, qi, ki: (0, 0)),
        pl.BlockSpec((sq, tq, D), lambda b, qi, ki: (b, qi, 0)),
        _const_spec((1, D), lambda b, qi, ki: (0, 0)),
        _const_spec((1, D), lambda b, qi, ki: (0, 0)),
    ]
    args += [wo, bo.reshape(1, D), residual,
             gamma.reshape(1, D), beta.reshape(1, D)]

    it = residual.dtype.itemsize
    block_bytes = [tq * D * it, tk * D * it, tk * D * it,
                   (tq * tk if mask_mode == "array" else 0),
                   D * D * it, D * it, tq * D * it, D * it, D * it,
                   tq * D * it]
    scratch_bytes = (2 * n_heads * tq + tq * D) * 4

    return pl.pallas_call(
        kernel,
        out_shape=jax.ShapeDtypeStruct((B, T, D), residual.dtype),
        grid=(B, pl.cdiv(T, tq), pl.cdiv(S, tk)),
        in_specs=in_specs,
        out_specs=pl.BlockSpec((sq, tq, D), lambda b, qi, ki: (b, qi, 0)),
        scratch_shapes=[
            pltpu.VMEM((n_heads, tq, 1), jnp.float32),   # running max m
            pltpu.VMEM((n_heads, tq, 1), jnp.float32),   # running sum l
            pltpu.VMEM((tq, D), jnp.float32),            # lane-dense acc
        ],
        compiler_params=_compiler_params(
            ("parallel", "parallel", "arbitrary"), block_bytes, scratch_bytes),
    )(*args)


# --------------------------------------------------------------------------
# Fused feed-forward block, tiled over d_ff:
#   relu(x@W1 + b1) @ W2 accumulated in f32 VMEM; +b2 +residual -> LayerNorm
# --------------------------------------------------------------------------

def _make_ffn_kernel(eps):
    def kernel(x_ref, w1_ref, b1_ref, w2_ref, b2_ref, g_ref, beta_ref,
               o_ref, acc_ref):
        kf = pl.program_id(1)

        @pl.when(kf == 0)
        def _():
            acc_ref[...] = jnp.zeros_like(acc_ref)

        x = x_ref[...]
        h = (jnp.dot(x, w1_ref[...], preferred_element_type=jnp.float32)
             + b1_ref[...].astype(jnp.float32))
        h = jnp.maximum(h, 0.0)                               # ReLU per chunk
        acc_ref[...] += jnp.dot(h.astype(w2_ref.dtype), w2_ref[...],
                                preferred_element_type=jnp.float32)

        @pl.when(kf == pl.num_programs(1) - 1)
        def _():
            y = (acc_ref[...] + b2_ref[...].astype(jnp.float32)
                 + x.astype(jnp.float32))                     # residual = FFN input
            mean = jnp.mean(y, axis=-1, keepdims=True)
            var = jnp.mean((y - mean) ** 2, axis=-1, keepdims=True)
            yn = (y - mean) * jax.lax.rsqrt(var + eps)
            o_ref[...] = (yn * g_ref[...].astype(jnp.float32)
                          + beta_ref[...].astype(jnp.float32)).astype(o_ref.dtype)
    return kernel


def ffn_block(x, w1, b1, w2, b2, gamma, beta, *, eps=1e-5, row_tile=256,
              ff_tile=512):
    n, d = x.shape
    d_ff = w1.shape[1]
    tm = min(row_tile, n)
    tkf = min(ff_tile, d_ff)
    it = x.dtype.itemsize
    return pl.pallas_call(
        _make_ffn_kernel(eps),
        out_shape=jax.ShapeDtypeStruct((n, d), x.dtype),
        grid=(pl.cdiv(n, tm), pl.cdiv(d_ff, tkf)),
        in_specs=[
            pl.BlockSpec((tm, d), lambda i, kf: (i, 0)),
            pl.BlockSpec((d, tkf), lambda i, kf: (0, kf)),
            pl.BlockSpec((1, tkf), lambda i, kf: (0, kf)),
            pl.BlockSpec((tkf, d), lambda i, kf: (kf, 0)),
            _const_spec((1, d), lambda i, kf: (0, 0)),
            _const_spec((1, d), lambda i, kf: (0, 0)),
            _const_spec((1, d), lambda i, kf: (0, 0)),
        ],
        out_specs=pl.BlockSpec((tm, d), lambda i, kf: (i, 0)),
        scratch_shapes=[pltpu.VMEM((tm, d), jnp.float32)],
        compiler_params=_compiler_params(
            ("parallel", "arbitrary"),
            [tm * d * it, d * tkf * it, tkf * it, tkf * d * it,
             3 * d * it, tm * d * it],
            scratch_bytes=tm * d * 4),
    )(x, w1, b1.reshape(1, d_ff), w2, b2.reshape(1, d),
      gamma.reshape(1, d), beta.reshape(1, d))


# --------------------------------------------------------------------------
# Decoder layer
# --------------------------------------------------------------------------

def prepare_decoder_params(params):
    """One-time weight packing so the per-forward path has no concatenations."""
    sa, ca = params["self_att"], params["cross_att"]
    prepared = dict(params)
    prepared["self_wqkv"] = jnp.concatenate([sa["wq"], sa["wk"], sa["wv"]], axis=1)
    prepared["self_bqkv"] = jnp.concatenate([sa["bq"], sa["bk"], sa["bv"]], axis=0)
    prepared["cross_wkv"] = jnp.concatenate([ca["wk"], ca["wv"]], axis=1)
    prepared["cross_bkv"] = jnp.concatenate([ca["bk"], ca["bv"]], axis=0)
    return prepared


def decoder_layer(params, x, context, trg_mask, src_trg_mask, n_heads, eps=1e-5):
    B, T, D = x.shape
    S = context.shape[1]
    sa, ca = params["self_att"], params["cross_att"]

    # 1) masked self-attention: one fused QKV projection (activation read once),
    #    then flash-tiled attention + Wo + residual + LayerNorm in one kernel.
    qkv = fused_linear(x.reshape(B * T, D), params["self_wqkv"],
                       params["self_bqkv"]).reshape(B, T, 3 * D)
    out = fused_mha_block(_col_view(qkv, 0, D), _col_view(qkv, 1, D),
                          _col_view(qkv, 2, D), mask=trg_mask,
                          wo=sa["wo"], bo=sa["bo"], residual=x,
                          gamma=params["norm1_g"], beta=params["norm1_b"],
                          n_heads=n_heads, eps=eps)

    # 2) cross-attention: Q from the decoder stream, fused KV from context,
    #    then flash-tiled attention + Wo + residual + LayerNorm.
    q = fused_linear(out.reshape(B * T, D), ca["wq"], ca["bq"]).reshape(B, T, D)
    kv = fused_linear(context.reshape(B * S, D), params["cross_wkv"],
                      params["cross_bkv"]).reshape(B, S, 2 * D)
    out = fused_mha_block(_col_view(q, 0, D), _col_view(kv, 0, D),
                          _col_view(kv, 1, D), mask=src_trg_mask,
                          wo=ca["wo"], bo=ca["bo"], residual=out,
                          gamma=params["norm2_g"], beta=params["norm2_b"],
                          n_heads=n_heads, eps=eps)

    # 3) feed-forward (d_ff-tiled) + residual + LayerNorm, fused.
    out = ffn_block(out.reshape(B * T, D),
                    params["ff_w1"], params["ff_b1"],
                    params["ff_w2"], params["ff_b2"],
                    params["norm3_g"], params["norm3_b"], eps=eps)
    return out.reshape(B, T, D)


# --------------------------------------------------------------------------
# Pure-JAX reference (same math, no Pallas)
# --------------------------------------------------------------------------

def _ref_mha(p, q, k, v, mask, n_heads):
    B, T, D = q.shape
    S = k.shape[1]
    dh = D // n_heads
    q2 = (q @ p["wq"] + p["bq"]).reshape(B, T, n_heads, dh).transpose(0, 2, 1, 3)
    k2 = (k @ p["wk"] + p["bk"]).reshape(B, S, n_heads, dh).transpose(0, 2, 1, 3)
    v2 = (v @ p["wv"] + p["bv"]).reshape(B, S, n_heads, dh).transpose(0, 2, 1, 3)
    s = jnp.einsum("bhtd,bhsd->bhts", q2, k2) / (dh ** 0.5)
    if mask is not None:
        s = jnp.where(mask[:, None, :, :] > 0, s, -1e9)
    a = jax.nn.softmax(s, axis=-1)
    o = jnp.einsum("bhts,bhsd->bhtd", a, v2).transpose(0, 2, 1, 3).reshape(B, T, D)
    return o @ p["wo"] + p["bo"]


def _ref_ln(x, g, b, eps=1e-5):
    m = jnp.mean(x, axis=-1, keepdims=True)
    v = jnp.mean((x - m) ** 2, axis=-1, keepdims=True)
    return (x - m) * jax.lax.rsqrt(v + eps) * g + b


def decoder_layer_ref(params, x, context, trg_mask, src_trg_mask, n_heads):
    out = _ref_mha(params["self_att"], x, x, x, trg_mask, n_heads) + x
    out = _ref_ln(out, params["norm1_g"], params["norm1_b"])
    _x = out
    out = _ref_mha(params["cross_att"], out, context, context, src_trg_mask,
                   n_heads) + _x
    out = _ref_ln(out, params["norm2_g"], params["norm2_b"])
    _x = out
    h = jnp.maximum(out @ params["ff_w1"] + params["ff_b1"], 0.0)
    out = h @ params["ff_w2"] + params["ff_b2"] + _x
    return _ref_ln(out, params["norm3_g"], params["norm3_b"])


# --------------------------------------------------------------------------
# Parameter init + main
# --------------------------------------------------------------------------

def init_params(key, d_model, d_ff):
    def attn_params(k):
        ks = jax.random.split(k, 4)
        return {
            "wq": 0.02 * jax.random.normal(ks[0], (d_model, d_model), jnp.float32),
            "bq": jnp.zeros((d_model,), jnp.float32),
            "wk": 0.02 * jax.random.normal(ks[1], (d_model, d_model), jnp.float32),
            "bk": jnp.zeros((d_model,), jnp.float32),
            "wv": 0.02 * jax.random.normal(ks[2], (d_model, d_model), jnp.float32),
            "bv": jnp.zeros((d_model,), jnp.float32),
            "wo": 0.02 * jax.random.normal(ks[3], (d_model, d_model), jnp.float32),
            "bo": jnp.zeros((d_model,), jnp.float32),
        }

    k1, k2, k3, k4 = jax.random.split(key, 4)
    return {
        "self_att": attn_params(k1),
        "cross_att": attn_params(k2),
        "ff_w1": 0.02 * jax.random.normal(k3, (d_model, d_ff), jnp.float32),
        "ff_b1": jnp.zeros((d_ff,), jnp.float32),
        "ff_w2": 0.02 * jax.random.normal(k4, (d_ff, d_model), jnp.float32),
        "ff_b2": jnp.zeros((d_model,), jnp.float32),
        "norm1_g": jnp.ones((d_model,), jnp.float32),
        "norm1_b": jnp.zeros((d_model,), jnp.float32),
        "norm2_g": jnp.ones((d_model,), jnp.float32),
        "norm2_b": jnp.zeros((d_model,), jnp.float32),
        "norm3_g": jnp.ones((d_model,), jnp.float32),
        "norm3_b": jnp.zeros((d_model,), jnp.float32),
    }


if __name__ == "__main__":
    # d_model is a multiple of 128 so the Q/K/V column-block views of the fused
    # qkv projection are lane-aligned (zero-copy); shapes stay small.
    B, T, S = 2, 8, 16
    d_model, n_heads = 128, 4
    d_ff = 4 * d_model

    root = jax.random.PRNGKey(0)
    kp, kx, kc = jax.random.split(root, 3)
    params = init_params(kp, d_model, d_ff)
    prepared = prepare_decoder_params(params)

    x = jax.random.normal(kx, (B, T, d_model), jnp.float32)
    context = jax.random.normal(kc, (B, S, d_model), jnp.float32)

    # Causal target mask is generated in-kernel (no mask DMA); the explicit
    # array below is only for the pure-JAX reference.
    trg_mask_ref = jnp.tril(jnp.ones((T, T), jnp.float32))[None].repeat(B, axis=0)
    # Padding mask for cross-attention (exercises the int8 array-mask path):
    # batch 1 masks out the last 4 context positions.
    src_lens = jnp.array([S, S - 4], jnp.int32)
    src_trg_mask = (jnp.arange(S)[None, None, :] < src_lens[:, None, None])
    src_trg_mask = jnp.broadcast_to(src_trg_mask, (B, T, S)).astype(jnp.float32)

    out = decoder_layer(prepared, x, context, trg_mask="causal",
                        src_trg_mask=src_trg_mask, n_heads=n_heads)
    out = jax.block_until_ready(out)

    ref = decoder_layer_ref(params, x, context, trg_mask_ref, src_trg_mask,
                            n_heads)
    assert out.shape == (B, T, d_model)
    # tolerance covers the approx EUP reciprocal in the softmax normalization
    assert jnp.allclose(out, ref, rtol=1e-2, atol=1e-2), "mismatch vs JAX reference"

    print("KERNEL_OK")
</pallas_src>

<mosaic_0001>
module attributes {stable_mosaic.version = 11 : i64} {
  func.func @_linear_kernel(%arg0: i32, %arg1: i32, %arg2: memref<16x128xf32, #tpu.memory_space<vmem>>, %arg3: memref<128x384xf32, #tpu.memory_space<vmem>>, %arg4: memref<1x384xf32, #tpu.memory_space<vmem>>, %arg5: memref<16x384xf32, #tpu.memory_space<vmem>>) attributes {dimension_semantics = [#tpu.dimension_semantics<parallel>, #tpu.dimension_semantics<parallel>], iteration_bounds = array<i64: 1, 1>, scalar_prefetch = 0 : i64, scratch_operands = 0 : i64, tpu.core_type = #tpu.core_type<tc>, window_params = [{transform_indices = @transform_0, window_bounds = array<i64: 16, 128>}, {transform_indices = @transform_1, window_bounds = array<i64: 128, 384>}, {transform_indices = @transform_2, window_bounds = array<i64: 1, 384>}, {transform_indices = @transform_3, window_bounds = array<i64: 16, 384>}]} {
    %c0 = arith.constant 0 : index
    %c0_0 = arith.constant 0 : index
    %0 = vector.load %arg2[%c0, %c0_0] : memref<16x128xf32, #tpu.memory_space<vmem>>, vector<16x128xf32>
    %c0_1 = arith.constant 0 : index
    %c0_2 = arith.constant 0 : index
    %1 = vector.load %arg3[%c0_1, %c0_2] : memref<128x384xf32, #tpu.memory_space<vmem>>, vector<128x384xf32>
    %cst = arith.constant dense<0.000000e+00> : vector<16x384xf32>
    %2 = tpu.matmul %0, %1, %cst {dimension_numbers = #tpu.dot_dimension_numbers<[1], [0], [0], [1], [0, 0, 1, 1], [], []>} : vector<16x128xf32>, vector<128x384xf32>, vector<16x384xf32> -> vector<16x384xf32>
    %c0_3 = arith.constant 0 : index
    %c0_4 = arith.constant 0 : index
    %3 = vector.load %arg4[%c0_3, %c0_4] : memref<1x384xf32, #tpu.memory_space<vmem>>, vector<1x384xf32>
    %4 = vector.broadcast %3 : vector<1x384xf32> to vector<16x384xf32>
    %5 = arith.addf %2, %4 : vector<16x384xf32>
    %c0_5 = arith.constant 0 : index
    %c0_6 = arith.constant 0 : index
    %6 = vector.load %arg5[%c0_5, %c0_6] : memref<16x384xf32, #tpu.memory_space<vmem>>, vector<16x384xf32>
    tpu.vector_store %arg5[%c0_5, %c0_6], %5 {strides = array<i32>} : memref<16x384xf32, #tpu.memory_space<vmem>>, vector<16x384xf32>,
    return
  }
  func.func @transform_0(%arg0: i32, %arg1: i32) -> (i32, i32) {
    %c0_i32 = arith.constant 0 : i32
    %c0_i32_0 = arith.constant 0 : i32
    return %arg0, %c0_i32 : i32, i32
  }
  func.func @transform_1(%arg0: i32, %arg1: i32) -> (i32, i32) {
    %c0_i32 = arith.constant 0 : i32
    %c0_i32_0 = arith.constant 0 : i32
    return %c0_i32, %arg1 : i32, i32
  }
  func.func @transform_2(%arg0: i32, %arg1: i32) -> (i32, i32) {
    %c0_i32 = arith.constant 0 : i32
    %c0_i32_0 = arith.constant 0 : i32
    return %c0_i32, %arg1 : i32, i32
  }
  func.func @transform_3(%arg0: i32, %arg1: i32) -> (i32, i32) {
    %c0_i32 = arith.constant 0 : i32
    return %arg0, %arg1 : i32, i32
  }
}

</mosaic_0001>

<llo_original>
// kernel: tpu_custom_call.1
$region0: #{tpu_custom_call.1}
  #allocation0 [shape = 'u32[]', space=smem, size = 0x4, offset = 0x4, fixed_abs, tag = 'smem constant byte address 0x4 - core index']
  #allocation1 [shape = 'u32[144,128]{1,0:T(1,128)}', space=vmem, size = 0x12000, scoped, tag = 'internal scratch']
  %s0 = inlined_call_operand.hbm [shape: f32[16,128], index: 0, kind: input, shape index: {}]
  %s1 = inlined_call_operand.hbm [shape: f32[128,384], index: 1, kind: input, shape index: {}]
  %s2 = inlined_call_operand.vmem [shape: f32[1,384], index: 2, kind: input, shape index: {}]
  %s3 = inlined_call_operand.hbm [shape: f32[16,384], index: 3, kind: output, shape index: {}]
  %s4 = sld [smem:[#allocation0]]
  $region30: #{tpu_custom_call.1} parent=0
    _
  %s6 = ssub.s32 1, %s4
  %s7 = scalar_select 0, %s6, %s4
  $region1: #{tpu_custom_call.1} parent=0
    #allocation2 [shape = 'u8[8192]{0}', space=vmem, size = 0x2000, scoped, tag = 'input window, operand 0, single buffered']
    #allocation3 [shape = 's32[1]{0}', space=sflag, size = 0x4, scoped, tag = 'scoped memory for tpu_custom_call.1']
    #allocation4 [shape = 's32[1]{0}', space=sflag, size = 0x4, scoped, tag = 'scoped memory for tpu_custom_call.1']
    #allocation5 [shape = 'u8[196608]{0}', space=vmem, size = 0x30000, scoped, tag = 'input window, operand 1, single buffered']
    #allocation6 [shape = 's32[1]{0}', space=sflag, size = 0x4, scoped, tag = 'scoped memory for tpu_custom_call.1']
    #allocation7 [shape = 'u8[24576]{0}', space=vmem, size = 0x6000, scoped, tag = 'output window, operand 0, single buffered']
    %8 = vsyncpa [#allocation3], 0
    %9 = vsyncpa [#allocation6], 0
    %10 = vsyncpa [#allocation4], 0
    // Predicated region
    $region2: #{tpu_custom_call.1} parent=1 // pred_check
      _
    $region3: #{tpu_custom_call.1} parent=1 // pred_check_branch
      %12 = sbr.rel (0) target = $region5
    $region4: #{tpu_custom_call.1} parent=1 // pred_region
      %s14 = ssub.s32 256, 256
      %15 = vsyncadd [#allocation3], %s14
      %s16 = sshll.u32 [#allocation2], 4
      %s17 = int_to_ptr.vmem [resolvable:$true] %s16
      %22 = dma.hbm_to_vmem [thread:$0]  %s0, 256, %s17, [#allocation3], 128, 128, 8
    $region5: #{tpu_custom_call.1} parent=1 // pred_fallthru
      _
    // Predicated region
    $region6: #{tpu_custom_call.1} parent=1 // pred_check
      _
    $region7: #{tpu_custom_call.1} parent=1 // pred_check_branch
      %24 = sbr.rel (0) target = $region9
    $region8: #{tpu_custom_call.1} parent=1 // pred_region
      %s26 = ssub.s32 6144, 6144
      %27 = vsyncadd [#allocation6], %s26
      %s28 = sshll.u32 [#allocation5], 4
      %s29 = int_to_ptr.vmem [resolvable:$true] %s28
      %34 = dma.hbm_to_vmem [thread:$0]  %s1, 6144, %s29, [#allocation6], 384, 384, 24
    $region9: #{tpu_custom_call.1} parent=1 // pred_fallthru
      _
    // Predicated region
    $region10: #{tpu_custom_call.1} parent=1 // pred_check
      _
    $region11: #{tpu_custom_call.1} parent=1 // pred_check_branch
      %36 = sbr.rel (0) target = $region13
    $region12: #{tpu_custom_call.1} parent=1 // pred_region
      _
    $region13: #{tpu_custom_call.1} parent=1 // pred_fallthru
      _
    // Predicated region
    $region14: #{tpu_custom_call.1} parent=1 // pred_check
      _
    $region15: #{tpu_custom_call.1} parent=1 // pred_check_branch
      %38 = sbr.rel (0) target = $region17
    $region16: #{tpu_custom_call.1} parent=1 // pred_region
      %39 = dma.done [#allocation3], 256
    $region17: #{tpu_custom_call.1} parent=1 // pred_fallthru
      _
    // Predicated region
    $region18: #{tpu_custom_call.1} parent=1 // pred_check
      _
    $region19: #{tpu_custom_call.1} parent=1 // pred_check_branch
      %41 = sbr.rel (0) target = $region21
    $region20: #{tpu_custom_call.1} parent=1 // pred_region
      %42 = dma.done [#allocation6], 6144
    $region21: #{tpu_custom_call.1} parent=1 // pred_fallthru
      _
    %v43 = vld [vmem:[#allocation2] sm:$0xff]
    %v44 = vld [vmem:[#allocation2 + $0x8] sm:$0xff]
    %v45 = vld [vmem:[#allocation5] sm:$0xff]
    %v46 = vld [vmem:[#allocation5 + $0x8] sm:$0xff]
    %v47 = vld [vmem:[#allocation5 + $0x10] sm:$0xff]
    %v48 = vld [vmem:[#allocation5 + $0x18] sm:$0xff]
    %v49 = vld [vmem:[#allocation5 + $0x20] sm:$0xff]
    %v50 = vld [vmem:[#allocation5 + $0x28] sm:$0xff]
    %v51 = vld [vmem:[#allocation5 + $0x30] sm:$0xff]
    %v52 = vld [vmem:[#allocation5 + $0x38] sm:$0xff]
    %v53 = vld [vmem:[#allocation5 + $0x40] sm:$0xff]
    %v54 = vld [vmem:[#allocation5 + $0x48] sm:$0xff]
    %v55 = vld [vmem:[#allocation5 + $0x50] sm:$0xff]
    %v56 = vld [vmem:[#allocation5 + $0x58] sm:$0xff]
    %v57 = vld [vmem:[#allocation5 + $0x60] sm:$0xff]
    %v58 = vld [vmem:[#allocation5 + $0x68] sm:$0xff]
    %v59 = vld [vmem:[#allocation5 + $0x70] sm:$0xff]
    %v60 = vld [vmem:[#allocation5 + $0x78] sm:$0xff]
    %v61 = vld [vmem:[#allocation5 + $0x80] sm:$0xff]
    %v62 = vld [vmem:[#allocation5 + $0x88] sm:$0xff]
    %v63 = vld [vmem:[#allocation5 + $0x90] sm:$0xff]
    %v64 = vld [vmem:[#allocation5 + $0x98] sm:$0xff]
    %v65 = vld [vmem:[#allocation5 + $0xa0] sm:$0xff]
    %v66 = vld [vmem:[#allocation5 + $0xa8] sm:$0xff]
    %v67 = vld [vmem:[#allocation5 + $0xb0] sm:$0xff]
    %v68 = vld [vmem:[#allocation5 + $0xb8] sm:$0xff]
    %v69 = vld [vmem:[#allocation5 + $0xc0] sm:$0xff]
    %v70 = vld [vmem:[#allocation5 + $0xc8] sm:$0xff]
    %v71 = vld [vmem:[#allocation5 + $0xd0] sm:$0xff]
    %v72 = vld [vmem:[#allocation5 + $0xd8] sm:$0xff]
    %v73 = vld [vmem:[#allocation5 + $0xe0] sm:$0xff]
    %v74 = vld [vmem:[#allocation5 + $0xe8] sm:$0xff]
    %v75 = vld [vmem:[#allocation5 + $0xf0] sm:$0xff]
    %v76 = vld [vmem:[#allocation5 + $0xf8] sm:$0xff]
    %v77 = vld [vmem:[#allocation5 + $0x100] sm:$0xff]
    %v78 = vld [vmem:[#allocation5 + $0x108] sm:$0xff]
    %v79 = vld [vmem:[#allocation5 + $0x110] sm:$0xff]
    %v80 = vld [vmem:[#allocation5 + $0x118] sm:$0xff]
    %v81 = vld [vmem:[#allocation5 + $0x120] sm:$0xff]
    %v82 = vld [vmem:[#allocation5 + $0x128] sm:$0xff]
    %v83 = vld [vmem:[#allocation5 + $0x130] sm:$0xff]
    %v84 = vld [vmem:[#allocation5 + $0x138] sm:$0xff]
    %v85 = vld [vmem:[#allocation5 + $0x140] sm:$0xff]
    %v86 = vld [vmem:[#allocation5 + $0x148] sm:$0xff]
    %v87 = vld [vmem:[#allocation5 + $0x150] sm:$0xff]
    %v88 = vld [vmem:[#allocation5 + $0x158] sm:$0xff]
    %v89 = vld [vmem:[#allocation5 + $0x160] sm:$0xff]
    %v90 = vld [vmem:[#allocation5 + $0x168] sm:$0xff]
    %v91 = vld [vmem:[#allocation5 + $0x170] sm:$0xff]
    %v92 = vld [vmem:[#allocation5 + $0x178] sm:$0xff]
    %v93 = vld [vmem:[%s2] sm:$0x7]
    %v95 = vlaneseq
    %v96 = vshrl.u32 %v95, 7
    %v97 = vsub.s32 0, %v96
    %v98 = vrot.slane %v93, %v97
    %v99 = vlaneseq
    %v100 = vshrl.u32 %v99, 7
    %v101 = vsub.s32 1, %v100
    %v102 = vrot.slane %v93, %v101
    %v103 = vlaneseq
    %v104 = vshrl.u32 %v103, 7
    %v105 = vsub.s32 2, %v104
    %v106 = vrot.slane %v93, %v105
    %110 = vmatprep.subr.mxu0 %v46
    %111 = vmatpush1.msra.mxu0 %v45
    %112 = vmatprep.subr.mxu0 %v49
    %113 = vmatpush1.msra.mxu0 %v48
    %114 = vmatprep.subr.mxu0 %v52
    %115 = vmatpush1.msra.mxu0 %v51
    %116 = vmatprep.subr.mxu0 %v55
    %117 = vmatpush1.msra.mxu0 %v54
    %118 = vmatprep.subr.mxu0 %v58
    %119 = vmatpush1.msra.mxu0 %v57
    %120 = vmatprep.subr.mxu0 %v61
    %121 = vmatpush1.msra.mxu0 %v60
    %122 = vmatprep.subr.mxu0 %v64
    %123 = vmatpush1.msra.mxu0 %v63
    %124 = vmatprep.subr.mxu0 %v67
    %125 = vmatpush1.msra.mxu0 %v66
    %126 = vmatprep.subr.mxu0 %v70
    %127 = vmatpush1.msra.mxu0 %v69
    %128 = vmatprep.subr.mxu0 %v73
    %129 = vmatpush1.msra.mxu0 %v72
    %130 = vmatprep.subr.mxu0 %v76
    %131 = vmatpush1.msra.mxu0 %v75
    %132 = vmatprep.subr.mxu0 %v79
    %133 = vmatpush1.msra.mxu0 %v78
    %134 = vmatprep.subr.mxu0 %v82
    %135 = vmatpush1.msra.mxu0 %v81
    %136 = vmatprep.subr.mxu0 %v85
    %137 = vmatpush1.msra.mxu0 %v84
    %138 = vmatprep.subr.mxu0 %v88
    %139 = vmatpush1.msra.mxu0 %v87
    %140 = vmatprep.subr.mxu0 %v91
    %141 = vmatpush1.msra.mxu0 %v90
    %142 = vmatprep.subr.mxu0 0.0
    %143 = vmatpush1.msra.mxu0 0.0
    %144 = vmatprep.subr.mxu0 0.0
    %145 = vmatpush1.msra.mxu0 0.0
    %146 = vmatprep.subr.mxu0 0.0
    %147 = vmatpush1.msra.mxu0 0.0
    %148 = vmatprep.subr.mxu0 0.0
    %149 = vmatpush1.msra.mxu0 0.0
    %150 = vmatprep.subr.mxu0 0.0
    %151 = vmatpush1.msra.mxu0 0.0
    %152 = vmatprep.subr.mxu0 0.0
    %153 = vmatpush1.msra.mxu0 0.0
    %154 = vmatprep.subr.mxu0 0.0
    %155 = vmatpush1.msra.mxu0 0.0
    %156 = vmatprep.subr.mxu0 0.0
    %157 = vmatpush1.msra.mxu0 0.0
    %158 = vmatprep.subr.mxu0 0.0
    %159 = vmatpush1.msra.mxu0 0.0
    %160 = vmatprep.subr.mxu0 0.0
    %161 = vmatpush1.msra.mxu0 0.0
    %162 = vmatprep.subr.mxu0 0.0
    %163 = vmatpush1.msra.mxu0 0.0
    %164 = vmatprep.subr.mxu0 0.0
    %165 = vmatpush1.msra.mxu0 0.0
    %166 = vmatprep.subr.mxu0 0.0
    %167 = vmatpush1.msra.mxu0 0.0
    %168 = vmatprep.subr.mxu0 0.0
    %169 = vmatpush1.msra.mxu0 0.0
    %170 = vmatprep.subr.mxu0 0.0
    %171 = vmatpush1.msra.mxu0 0.0
    %172 = vmatprep.subr.mxu0 0.0
    %173 = vmatpush1.msra.mxu0 0.0
    %174 = vmatprep.mubr.f32.mxu0 0.0
    %175 = vmatmul.mubr.f32.gmra.mrb[0].mxu0 %v43
    %v176 = vpop.f32.mrb[0].mxu0
    %v177 = vadd.f32 %v98, %v176
    %v178 = vpop.f32.mrb[0].mxu0
    %v179 = vadd.f32 %v102, %v178
    %180 = vmatprep.mubr.f32.mxu0 0.0
    %181 = vmatmul.mubr.f32.gmra.mrb[0].mxu0 %v44
    %v182 = vpop.f32.mrb[0].mxu0
    %v183 = vadd.f32 %v98, %v182
    %v184 = vpop.f32.mrb[0].mxu0
    %v185 = vadd.f32 %v102, %v184
    %186 = vdwg.mxu0
    %187 = vmatprep.subr.mxu0 0.0
    %188 = vmatpush1.msra.mxu0 %v47
    %189 = vmatprep.subr.mxu0 0.0
    %190 = vmatpush1.msra.mxu0 %v50
    %191 = vmatprep.subr.mxu0 0.0
    %192 = vmatpush1.msra.mxu0 %v53
    %193 = vmatprep.subr.mxu0 0.0
    %194 = vmatpush1.msra.mxu0 %v56
    %195 = vmatprep.subr.mxu0 0.0
    %196 = vmatpush1.msra.mxu0 %v59
    %197 = vmatprep.subr.mxu0 0.0
    %198 = vmatpush1.msra.mxu0 %v62
    %199 = vmatprep.subr.mxu0 0.0
    %200 = vmatpush1.msra.mxu0 %v65
    %201 = vmatprep.subr.mxu0 0.0
    %202 = vmatpush1.msra.mxu0 %v68
    %203 = vmatprep.subr.mxu0 0.0
    %204 = vmatpush1.msra.mxu0 %v71
    %205 = vmatprep.subr.mxu0 0.0
    %206 = vmatpush1.msra.mxu0 %v74
    %207 = vmatprep.subr.mxu0 0.0
    %208 = vmatpush1.msra.mxu0 %v77
    %209 = vmatprep.subr.mxu0 0.0
    %210 = vmatpush1.msra.mxu0 %v80
    %211 = vmatprep.subr.mxu0 0.0
    %212 = vmatpush1.msra.mxu0 %v83
    %213 = vmatprep.subr.mxu0 0.0
    %214 = vmatpush1.msra.mxu0 %v86
    %215 = vmatprep.subr.mxu0 0.0
    %216 = vmatpush1.msra.mxu0 %v89
    %217 = vmatprep.subr.mxu0 0.0
    %218 = vmatpush1.msra.mxu0 %v92
    %219 = vmatprep.subr.mxu0 0.0
    %220 = vmatpush1.msra.mxu0 0.0
    %221 = vmatprep.subr.mxu0 0.0
    %222 = vmatpush1.msra.mxu0 0.0
    %223 = vmatprep.subr.mxu0 0.0
    %224 = vmatpush1.msra.mxu0 0.0
    %225 = vmatprep.subr.mxu0 0.0
    %226 = vmatpush1.msra.mxu0 0.0
    %227 = vmatprep.subr.mxu0 0.0
    %228 = vmatpush1.msra.mxu0 0.0
    %229 = vmatprep.subr.mxu0 0.0
    %230 = vmatpush1.msra.mxu0 0.0
    %231 = vmatprep.subr.mxu0 0.0
    %232 = vmatpush1.msra.mxu0 0.0
    %233 = vmatprep.subr.mxu0 0.0
    %234 = vmatpush1.msra.mxu0 0.0
    %235 = vmatprep.subr.mxu0 0.0
    %236 = vmatpush1.msra.mxu0 0.0
    %237 = vmatprep.subr.mxu0 0.0
    %238 = vmatpush1.msra.mxu0 0.0
    %239 = vmatprep.subr.mxu0 0.0
    %240 = vmatpush1.msra.mxu0 0.0
    %241 = vmatprep.subr.mxu0 0.0
    %242 = vmatpush1.msra.mxu0 0.0
    %243 = vmatprep.subr.mxu0 0.0
    %244 = vmatpush1.msra.mxu0 0.0
    %245 = vmatprep.subr.mxu0 0.0
    %246 = vmatpush1.msra.mxu0 0.0
    %247 = vmatprep.subr.mxu0 0.0
    %248 = vmatpush1.msra.mxu0 0.0
    %249 = vmatprep.subr.mxu0 0.0
    %250 = vmatpush1.msra.mxu0 0.0
    %251 = vmatprep.mubr.f32.mxu0 0.0
    %252 = vmatmul.mubr.f32.gmra.mrb[0].mxu0 %v43
    %v253 = vpop.f32.mrb[0].mxu0
    %v254 = vadd.f32 %v106, %v253
    %v255 = vpop.f32.mrb[0].mxu0
    %256 = vmatprep.mubr.f32.mxu0 0.0
    %257 = vmatmul.mubr.f32.gmra.mrb[0].mxu0 %v44
    %v258 = vpop.f32.mrb[0].mxu0
    %v259 = vadd.f32 %v106, %v258
    %v260 = vpop.f32.mrb[0].mxu0
    %261 = vdwg.mxu0
    %262 = vst [vmem:[#allocation7] sm:$0xff] %v177
    %263 = vst [vmem:[#allocation7 + $0x8] sm:$0xff] %v179
    %264 = vst [vmem:[#allocation7 + $0x10] sm:$0xff] %v254
    %265 = vst [vmem:[#allocation7 + $0x18] sm:$0xff] %v183
    %266 = vst [vmem:[#allocation7 + $0x20] sm:$0xff] %v185
    %267 = vst [vmem:[#allocation7 + $0x28] sm:$0xff] %v259
    // Predicated region
    $region22: #{tpu_custom_call.1} parent=1 // pred_check
      _
    $region23: #{tpu_custom_call.1} parent=1 // pred_check_branch
      %269 = sbr.rel (0) target = $region25
    $region24: #{tpu_custom_call.1} parent=1 // pred_region
      %s271 = ssub.s32 768, 768
      %272 = vsyncadd [#allocation4], %s271
      %s273 = sshll.u32 [#allocation7], 4
      %s274 = int_to_ptr.vmem [resolvable:$true] %s273
      %279 = dma.vmem_to_hbm [thread:$0]  %s274, 768, %s3, [#allocation4], 384, 384, 24
    $region25: #{tpu_custom_call.1} parent=1 // pred_fallthru
      _
    // Predicated region
    $region26: #{tpu_custom_call.1} parent=1 // pred_check
      _
    $region27: #{tpu_custom_call.1} parent=1 // pred_check_branch
      %281 = sbr.rel (0) target = $region29
    $region28: #{tpu_custom_call.1} parent=1 // pred_region
      %282 = dma.done [#allocation4], 768
    $region29: #{tpu_custom_call.1} parent=1 // pred_fallthru
      _
    %283 = vsyncpa [#allocation3], 1
    %284 = vsyncpa [#allocation6], 1
    %285 = vsyncpa [#allocation4], 1

</llo_original>
